<compile_context>
chip_gen: v5e
topology: v5e:2x2
jax: 0.10.0
libtpu: 0.0.40
codegen_flags: <defaults>
</compile_context>

<pallas_src>
import functools

import jax
import jax.numpy as jnp
from jax.experimental import pallas as pl
from jax.experimental.pallas import tpu as pltpu


def _round_up(x: int, m: int) -> int:
    return ((x + m - 1) // m) * m


def _make_kernel(*, batch: int, dropout_p: float, apply_dropout: bool):
    inv_b = 1.0 / float(batch)
    eps = 1e-5
    inv_keep = 1.0 / (1.0 - dropout_p) if apply_dropout else 1.0

    def _epilogue(acc_ref, u_ref, o_ref):
        y = acc_ref[...]                                  # (B, tn) f32
        # Fused one-pass batch statistics (biased variance, as BatchNorm1d training).
        s1 = jnp.sum(y, axis=0, keepdims=True)            # (1, tn)
        s2 = jnp.sum(y * y, axis=0, keepdims=True)        # (1, tn)
        mean = s1 * inv_b
        var = jnp.maximum(s2 * inv_b - mean * mean, 0.0)
        y = (y - mean) * jax.lax.rsqrt(var + eps)         # gamma=1, beta=0
        y = jnp.maximum(y, 0.0)                           # ReLU
        if apply_dropout:
            keep = u_ref[...] >= jnp.float32(dropout_p)   # single f32 compare
            y = jnp.where(keep, y * inv_keep, 0.0)        # inverted dropout
        o_ref[...] = y.astype(o_ref.dtype)

    if apply_dropout:
        def kernel(x_ref, w_ref, u_ref, o_ref, acc_ref):
            k = pl.program_id(1)

            @pl.when(k == 0)
            def _():
                acc_ref[...] = jnp.zeros_like(acc_ref)

            acc_ref[...] += jnp.dot(x_ref[...], w_ref[...],
                                    preferred_element_type=jnp.float32)

            @pl.when(k == pl.num_programs(1) - 1)
            def _():
                _epilogue(acc_ref, u_ref, o_ref)
    else:
        def kernel(x_ref, w_ref, o_ref, acc_ref):
            k = pl.program_id(1)

            @pl.when(k == 0)
            def _():
                acc_ref[...] = jnp.zeros_like(acc_ref)

            acc_ref[...] += jnp.dot(x_ref[...], w_ref[...],
                                    preferred_element_type=jnp.float32)

            @pl.when(k == pl.num_programs(1) - 1)
            def _():
                _epilogue(acc_ref, None, o_ref)

    return kernel


def nonlinear_activation(x, weight, bias, *, dropout_p: float,
                         dropout_uniforms=None, training: bool = True):
    """Forward pass of NonLinearActivation.

    x: (B, Fin) f32; weight: (Fout, Fin) f32 (PyTorch Linear layout); bias: (Fout,) f32.
    dropout_uniforms: (B, Fout) f32 in [0, 1), required when training and dropout_p > 0.
    """
    B, Fin = x.shape
    Fout = weight.shape[0]
    # Bias is exactly cancelled by the BatchNorm mean subtraction (and the module
    # zero-initializes it), so it never enters the kernel.
    del bias

    apply_dropout = bool(training) and float(dropout_p) > 0.0

    # Tile sizes: lane-dense multiples of 128; small enough that double-buffered
    # bf16 inputs + f32 accumulator stay far below v7x's ~32 MiB scoped VMEM.
    tk = min(512, _round_up(Fin, 128))
    tn = min(256, _round_up(Fout, 128))
    fin_pad = _round_up(Fin, tk)
    fout_pad = _round_up(Fout, tn)

    # bf16 MXU inputs (f32 accumulation inside the kernel); weight pre-transposed
    # to (Fin, Fout) so the MXU consumes it in native orientation.
    x_p = jnp.zeros((B, fin_pad), jnp.bfloat16).at[:, :Fin].set(x.astype(jnp.bfloat16))
    w_p = (jnp.zeros((fin_pad, fout_pad), jnp.bfloat16)
           .at[:Fin, :Fout].set(weight.T.astype(jnp.bfloat16)))

    inputs = [x_p, w_p]
    in_specs = [
        pl.BlockSpec((B, tk), lambda j, k: (0, k)),   # x: walk the reduction axis
        pl.BlockSpec((tk, tn), lambda j, k: (k, j)),  # w^T tile
    ]
    if apply_dropout:
        if dropout_uniforms is None:
            raise ValueError("dropout_uniforms required when training with dropout_p > 0")
        u_p = (jnp.ones((B, fout_pad), jnp.float32)
               .at[:, :Fout].set(dropout_uniforms.astype(jnp.float32)))
        inputs.append(u_p)
        in_specs.append(pl.BlockSpec((B, tn), lambda j, k: (0, j)))

    kernel = _make_kernel(batch=B, dropout_p=float(dropout_p),
                          apply_dropout=apply_dropout)

    out = pl.pallas_call(
        kernel,
        out_shape=jax.ShapeDtypeStruct((B, fout_pad), jnp.float32),
        grid_spec=pltpu.PrefetchScalarGridSpec(
            num_scalar_prefetch=0,
            grid=(fout_pad // tn, fin_pad // tk),   # (Fout tiles, Fin reduction last)
            in_specs=in_specs,
            out_specs=pl.BlockSpec((B, tn), lambda j, k: (0, j)),
            scratch_shapes=[pltpu.VMEM((B, tn), jnp.float32)],
        ),
        compiler_params=pltpu.CompilerParams(
            dimension_semantics=("parallel", "arbitrary")),
    )(*inputs)

    return out[:, :Fout]


if __name__ == "__main__":
    # Small shapes consistent with the module: 2-D (batch, features) input.
    batch, input_size, output_size = 8, 32, 16
    dropout = 0.5

    key = jax.random.PRNGKey(0)
    kx, kw, kd = jax.random.split(key, 3)

    x = jax.random.normal(kx, (batch, input_size), dtype=jnp.float32)

    # Deterministic parameter init matching torch.nn.init:
    #   kaiming_normal_(weight, mode='fan_in', nonlinearity='relu') -> N(0, sqrt(2/fan_in))
    #   zeros_(bias)
    w_std = (2.0 / input_size) ** 0.5
    weight = jax.random.normal(kw, (output_size, input_size), dtype=jnp.float32) * w_std
    bias = jnp.zeros((output_size,), dtype=jnp.float32)

    # Dropout uniforms (bit-exact torch RNG reproduction is impossible; the masking
    # math matches torch.nn.Dropout: keep with prob 1-p, scale kept by 1/(1-p)).
    u = jax.random.uniform(kd, (batch, output_size), dtype=jnp.float32)

    out = nonlinear_activation(x, weight, bias, dropout_p=dropout,
                               dropout_uniforms=u, training=True)
    out = jax.block_until_ready(out)

    # Pure-JAX reference (f32 matmul) with the same dropout uniforms.
    y = x @ weight.T + bias
    mean = jnp.mean(y, axis=0, keepdims=True)
    var = jnp.mean((y - mean) ** 2, axis=0, keepdims=True)
    y = (y - mean) / jnp.sqrt(var + 1e-5)
    y = jnp.maximum(y, 0.0)
    ref = jnp.where(u >= dropout, y / (1.0 - dropout), 0.0)

    assert out.shape == (batch, output_size)
    assert bool(jnp.all(jnp.isfinite(out)))
    max_err = float(jnp.max(jnp.abs(out - ref)))
    assert bool(jnp.allclose(out, ref, atol=5e-2, rtol=5e-2)), f"max_err={max_err}"
    print("KERNEL_OK")
</pallas_src>

<mosaic_0001>
module attributes {stable_mosaic.version = 11 : i64} {
  func.func @kernel(%arg0: i32, %arg1: i32, %arg2: memref<8x128xbf16, #tpu.memory_space<vmem>>, %arg3: memref<128x128xbf16, #tpu.memory_space<vmem>>, %arg4: memref<8x128xf32, #tpu.memory_space<vmem>>, %arg5: memref<8x128xf32, #tpu.memory_space<vmem>>, %arg6: memref<8x128xf32, #tpu.memory_space<vmem>>) attributes {dimension_semantics = [#tpu.dimension_semantics<parallel>, #tpu.dimension_semantics<arbitrary>], iteration_bounds = array<i64: 1, 1>, scalar_prefetch = 0 : i64, scratch_operands = 1 : i64, tpu.core_type = #tpu.core_type<tc>, window_params = [{transform_indices = @transform_0, window_bounds = array<i64: 8, 128>}, {transform_indices = @transform_1, window_bounds = array<i64: 128, 128>}, {transform_indices = @transform_2, window_bounds = array<i64: 8, 128>}, {transform_indices = @transform_3, window_bounds = array<i64: 8, 128>}]} {
    %c0_i32 = arith.constant 0 : i32
    %0 = arith.cmpi eq, %arg1, %c0_i32 : i32
    %1 = arith.extui %0 : i1 to i32
    %c0_i32_0 = arith.constant 0 : i32
    %2 = arith.cmpi ne, %1, %c0_i32_0 : i32
    scf.if %2 {
      %cst_10 = arith.constant 0.000000e+00 : f32
      %12 = vector.broadcast %cst_10 : f32 to vector<8x128xf32>
      %c0_11 = arith.constant 0 : index
      %c0_12 = arith.constant 0 : index
      %13 = vector.load %arg6[%c0_11, %c0_12] : memref<8x128xf32, #tpu.memory_space<vmem>>, vector<8x128xf32>
      tpu.vector_store %arg6[%c0_11, %c0_12], %12 {strides = array<i32>} : memref<8x128xf32, #tpu.memory_space<vmem>>, vector<8x128xf32>,
    } else {
    }
    %c0 = arith.constant 0 : index
    %c0_1 = arith.constant 0 : index
    %3 = vector.load %arg6[%c0, %c0_1] : memref<8x128xf32, #tpu.memory_space<vmem>>, vector<8x128xf32>
    %c0_2 = arith.constant 0 : index
    %c0_3 = arith.constant 0 : index
    %4 = vector.load %arg2[%c0_2, %c0_3] : memref<8x128xbf16, #tpu.memory_space<vmem>>, vector<8x128xbf16>
    %c0_4 = arith.constant 0 : index
    %c0_5 = arith.constant 0 : index
    %5 = vector.load %arg3[%c0_4, %c0_5] : memref<128x128xbf16, #tpu.memory_space<vmem>>, vector<128x128xbf16>
    %cst = arith.constant dense<0.000000e+00> : vector<8x128xf32>
    %6 = tpu.matmul %4, %5, %cst {dimension_numbers = #tpu.dot_dimension_numbers<[1], [0], [0], [1], [0, 0, 1, 1], [], []>} : vector<8x128xbf16>, vector<128x128xbf16>, vector<8x128xf32> -> vector<8x128xf32>
    %7 = arith.addf %3, %6 : vector<8x128xf32>
    %c0_6 = arith.constant 0 : index
    %c0_7 = arith.constant 0 : index
    %8 = vector.load %arg6[%c0_6, %c0_7] : memref<8x128xf32, #tpu.memory_space<vmem>>, vector<8x128xf32>
    tpu.vector_store %arg6[%c0_6, %c0_7], %7 {strides = array<i32>} : memref<8x128xf32, #tpu.memory_space<vmem>>, vector<8x128xf32>,
    %c0_i32_8 = arith.constant 0 : i32
    %9 = arith.cmpi eq, %arg1, %c0_i32_8 : i32
    %10 = arith.extui %9 : i1 to i32
    %c0_i32_9 = arith.constant 0 : i32
    %11 = arith.cmpi ne, %10, %c0_i32_9 : i32
    scf.if %11 {
      %c0_10 = arith.constant 0 : index
      %c0_11 = arith.constant 0 : index
      %12 = vector.load %arg6[%c0_10, %c0_11] : memref<8x128xf32, #tpu.memory_space<vmem>>, vector<8x128xf32>
      %cst_12 = arith.constant dense<0.000000e+00> : vector<128xf32>
      %13 = vector.multi_reduction <add>, %12, %cst_12 [0] : vector<8x128xf32> to vector<128xf32>
      %14 = vector.shape_cast %13 : vector<128xf32> to vector<1x128xf32>
      %15 = arith.mulf %12, %12 : vector<8x128xf32>
      %cst_13 = arith.constant dense<0.000000e+00> : vector<128xf32>
      %16 = vector.multi_reduction <add>, %15, %cst_13 [0] : vector<8x128xf32> to vector<128xf32>
      %17 = vector.shape_cast %16 : vector<128xf32> to vector<1x128xf32>
      %cst_14 = arith.constant 1.250000e-01 : f32
      %18 = vector.broadcast %cst_14 : f32 to vector<1x128xf32>
      %19 = arith.mulf %14, %18 : vector<1x128xf32>
      %cst_15 = arith.constant 1.250000e-01 : f32
      %20 = vector.broadcast %cst_15 : f32 to vector<1x128xf32>
      %21 = arith.mulf %17, %20 : vector<1x128xf32>
      %22 = arith.mulf %19, %19 : vector<1x128xf32>
      %23 = arith.subf %21, %22 : vector<1x128xf32>
      %cst_16 = arith.constant 0.000000e+00 : f32
      %24 = vector.broadcast %cst_16 : f32 to vector<1x128xf32>
      %25 = arith.maximumf %23, %24 : vector<1x128xf32>
      %26 = vector.broadcast %19 : vector<1x128xf32> to vector<8x128xf32>
      %27 = arith.subf %12, %26 : vector<8x128xf32>
      %cst_17 = arith.constant 9.99999974E-6 : f32
      %28 = vector.broadcast %cst_17 : f32 to vector<1x128xf32>
      %29 = arith.addf %25, %28 : vector<1x128xf32>
      %30 = math.rsqrt %29 : vector<1x128xf32>
      %31 = vector.broadcast %30 : vector<1x128xf32> to vector<8x128xf32>
      %32 = arith.mulf %27, %31 : vector<8x128xf32>
      %cst_18 = arith.constant 0.000000e+00 : f32
      %33 = vector.broadcast %cst_18 : f32 to vector<8x128xf32>
      %34 = arith.maximumf %32, %33 : vector<8x128xf32>
      %c0_19 = arith.constant 0 : index
      %c0_20 = arith.constant 0 : index
      %35 = vector.load %arg4[%c0_19, %c0_20] : memref<8x128xf32, #tpu.memory_space<vmem>>, vector<8x128xf32>
      %cst_21 = arith.constant 5.000000e-01 : f32
      %36 = vector.broadcast %cst_21 : f32 to vector<8x128xf32>
      %37 = arith.cmpf oge, %35, %36 : vector<8x128xf32>
      %cst_22 = arith.constant 2.000000e+00 : f32
      %38 = vector.broadcast %cst_22 : f32 to vector<8x128xf32>
      %39 = arith.mulf %34, %38 : vector<8x128xf32>
      %cst_23 = arith.constant 0.000000e+00 : f32
      %40 = vector.broadcast %cst_23 : f32 to vector<8x128xf32>
      %41 = arith.select %37, %39, %40 : vector<8x128xi1>, vector<8x128xf32>
      %c0_24 = arith.constant 0 : index
      %c0_25 = arith.constant 0 : index
      %42 = vector.load %arg5[%c0_24, %c0_25] : memref<8x128xf32, #tpu.memory_space<vmem>>, vector<8x128xf32>
      tpu.vector_store %arg5[%c0_24, %c0_25], %41 {strides = array<i32>} : memref<8x128xf32, #tpu.memory_space<vmem>>, vector<8x128xf32>,
    } else {
    }
    return
  }
  func.func @transform_0(%arg0: i32, %arg1: i32) -> (i32, i32) {
    %c0_i32 = arith.constant 0 : i32
    %c0_i32_0 = arith.constant 0 : i32
    return %c0_i32, %arg1 : i32, i32
  }
  func.func @transform_1(%arg0: i32, %arg1: i32) -> (i32, i32) {
    %c0_i32 = arith.constant 0 : i32
    return %arg1, %arg0 : i32, i32
  }
  func.func @transform_2(%arg0: i32, %arg1: i32) -> (i32, i32) {
    %c0_i32 = arith.constant 0 : i32
    %c0_i32_0 = arith.constant 0 : i32
    return %c0_i32, %arg0 : i32, i32
  }
  func.func @transform_3(%arg0: i32, %arg1: i32) -> (i32, i32) {
    %c0_i32 = arith.constant 0 : i32
    %c0_i32_0 = arith.constant 0 : i32
    return %c0_i32, %arg0 : i32, i32
  }
}

</mosaic_0001>

<llo_original>
// kernel: tpu_custom_call.1
$region0: #{tpu_custom_call.1}
  #allocation0 [shape = 'u32[]', space=smem, size = 0x4, offset = 0x4, fixed_abs, tag = 'smem constant byte address 0x4 - core index']
  #allocation1 [shape = 'u32[72,128]{1,0:T(1,128)}', space=vmem, size = 0x9000, scoped, tag = 'internal scratch']
  #allocation2 [shape = 'f32[8,128]{1,0:T(8,128)}', space=vmem, size = 0x1000, scoped, tag = 'scratch operand']
  %s0 = inlined_call_operand.hbm [shape: bf16[8,128], index: 0, kind: input, shape index: {}]
  %s1 = inlined_call_operand.hbm [shape: bf16[128,128], index: 1, kind: input, shape index: {}]
  %s2 = inlined_call_operand.hbm [shape: f32[8,128], index: 2, kind: input, shape index: {}]
  %s3 = inlined_call_operand.hbm [shape: f32[8,128], index: 3, kind: output, shape index: {}]
  %s4 = sld [smem:[#allocation0]]
  $region42: #{tpu_custom_call.1} parent=0
    _
  %s6 = ssub.s32 1, %s4
  %s7 = scalar_select 0, %s6, %s4
  $region1: #{tpu_custom_call.1} parent=0
    #allocation3 [shape = 'u8[2048]{0}', space=vmem, size = 0x800, scoped, tag = 'input window, operand 0, single buffered']
    #allocation4 [shape = 's32[1]{0}', space=sflag, size = 0x4, scoped, tag = 'scoped memory for tpu_custom_call.1']
    #allocation5 [shape = 's32[1]{0}', space=sflag, size = 0x4, scoped, tag = 'scoped memory for tpu_custom_call.1']
    #allocation6 [shape = 'u8[32768]{0}', space=vmem, size = 0x8000, scoped, tag = 'input window, operand 1, single buffered']
    #allocation7 [shape = 's32[1]{0}', space=sflag, size = 0x4, scoped, tag = 'scoped memory for tpu_custom_call.1']
    #allocation8 [shape = 'u8[4096]{0}', space=vmem, size = 0x1000, scoped, tag = 'input window, operand 2, single buffered']
    #allocation9 [shape = 'u8[4096]{0}', space=vmem, size = 0x1000, scoped, tag = 'output window, operand 0, single buffered']
    %8 = vsyncpa [#allocation4], 0
    %9 = vsyncpa [#allocation7], 0
    %10 = vsyncpa [#allocation5], 0
    // Predicated region
    $region2: #{tpu_custom_call.1} parent=1 // pred_check
      _
    $region3: #{tpu_custom_call.1} parent=1 // pred_check_branch
      %12 = sbr.rel (0) target = $region5
    $region4: #{tpu_custom_call.1} parent=1 // pred_region
      %14 = vsyncadd [#allocation4], 0
      %s16 = sshll.u32 %s0, 4
      %s17 = int_to_ptr.hbm [resolvable:$true] %s16
      %s18 = sshll.u32 [#allocation3], 4
      %s19 = int_to_ptr.vmem [resolvable:$true] %s18
      %21 = dma.hbm_to_vmem [thread:$0]  %s17, 64, %s19, [#allocation4]
    $region5: #{tpu_custom_call.1} parent=1 // pred_fallthru
      _
    // Predicated region
    $region6: #{tpu_custom_call.1} parent=1 // pred_check
      _
    $region7: #{tpu_custom_call.1} parent=1 // pred_check_branch
      %23 = sbr.rel (0) target = $region9
    $region8: #{tpu_custom_call.1} parent=1 // pred_region
      %25 = vsyncadd [#allocation7], 0
      %s26 = sshll.u32 %s1, 4
      %s27 = int_to_ptr.hbm [resolvable:$true] %s26
      %s28 = sshll.u32 [#allocation6], 4
      %s29 = int_to_ptr.vmem [resolvable:$true] %s28
      %34 = dma.hbm_to_vmem [thread:$0]  %s27, 1024, %s29, [#allocation7], 64, 64, 4
    $region9: #{tpu_custom_call.1} parent=1 // pred_fallthru
      _
    // Predicated region
    $region10: #{tpu_custom_call.1} parent=1 // pred_check
      _
    $region11: #{tpu_custom_call.1} parent=1 // pred_check_branch
      %36 = sbr.rel (0) target = $region13
    $region12: #{tpu_custom_call.1} parent=1 // pred_region
      %38 = vsyncadd [#allocation7], 0
      %s40 = sshll.u32 %s2, 4
      %s41 = int_to_ptr.hbm [resolvable:$true] %s40
      %s42 = sshll.u32 [#allocation8], 4
      %s43 = int_to_ptr.vmem [resolvable:$true] %s42
      %45 = dma.hbm_to_vmem [thread:$0]  %s41, 128, %s43, [#allocation7]
    $region13: #{tpu_custom_call.1} parent=1 // pred_fallthru
      _
    // Predicated region
    $region14: #{tpu_custom_call.1} parent=1 // pred_check
      _
    $region15: #{tpu_custom_call.1} parent=1 // pred_check_branch
      %47 = sbr.rel (0) target = $region17
    $region16: #{tpu_custom_call.1} parent=1 // pred_region
      %49 = dma.done [#allocation4], 64
    $region17: #{tpu_custom_call.1} parent=1 // pred_fallthru
      _
    // Predicated region
    $region18: #{tpu_custom_call.1} parent=1 // pred_check
      _
    $region19: #{tpu_custom_call.1} parent=1 // pred_check_branch
      %51 = sbr.rel (0) target = $region21
    $region20: #{tpu_custom_call.1} parent=1 // pred_region
      %53 = dma.done [#allocation7], 1024
    $region21: #{tpu_custom_call.1} parent=1 // pred_fallthru
      _
    // Predicated region
    $region22: #{tpu_custom_call.1} parent=1 // pred_check
      _
    $region23: #{tpu_custom_call.1} parent=1 // pred_check_branch
      %55 = sbr.rel (0) target = $region25
    $region24: #{tpu_custom_call.1} parent=1 // pred_region
      %57 = dma.done [#allocation7], 128
    $region25: #{tpu_custom_call.1} parent=1 // pred_fallthru
      _
    %p58 = scmp.eq.s32.totalorder 0, 0
    // Predicated region
    $region26: #{tpu_custom_call.1} parent=1 // pred_check
      %p59 = pneg %p58
    $region27: #{tpu_custom_call.1} parent=1 // pred_check_branch
      %61 = sbr.rel (%p59) target = $region29
    $region28: #{tpu_custom_call.1} parent=1 // pred_region
      %62 = vst [vmem:[#allocation2] sm:$0xff] 0.0
    $region29: #{tpu_custom_call.1} parent=1 // pred_fallthru
      _
    %v63 = vld [vmem:[#allocation2] sm:$0xff]
    %v64 = vld [vmem:[#allocation3] sm:$0xf]
    %v65 = vld [vmem:[#allocation6] sm:$0xf]
    %v66 = vld [vmem:[#allocation6 + $0x4] sm:$0xf]
    %v67 = vld [vmem:[#allocation6 + $0x8] sm:$0xf]
    %v68 = vld [vmem:[#allocation6 + $0xc] sm:$0xf]
    %v69 = vld [vmem:[#allocation6 + $0x10] sm:$0xf]
    %v70 = vld [vmem:[#allocation6 + $0x14] sm:$0xf]
    %v71 = vld [vmem:[#allocation6 + $0x18] sm:$0xf]
    %v72 = vld [vmem:[#allocation6 + $0x1c] sm:$0xf]
    %v73 = vld [vmem:[#allocation6 + $0x20] sm:$0xf]
    %v74 = vld [vmem:[#allocation6 + $0x24] sm:$0xf]
    %v75 = vld [vmem:[#allocation6 + $0x28] sm:$0xf]
    %v76 = vld [vmem:[#allocation6 + $0x2c] sm:$0xf]
    %v77 = vld [vmem:[#allocation6 + $0x30] sm:$0xf]
    %v78 = vld [vmem:[#allocation6 + $0x34] sm:$0xf]
    %v79 = vld [vmem:[#allocation6 + $0x38] sm:$0xf]
    %v80 = vld [vmem:[#allocation6 + $0x3c] sm:$0xf]
    %v97 = vunpack.c.l.b16 %v65
    %v98 = vunpack.c.l.b16 %v66
    %v99 = vunpack.c.l.b16 %v67
    %v100 = vunpack.c.l.b16 %v68
    %v101 = vunpack.c.l.b16 %v69
    %v102 = vunpack.c.l.b16 %v70
    %v103 = vunpack.c.l.b16 %v71
    %v104 = vunpack.c.l.b16 %v72
    %v105 = vunpack.c.l.b16 %v73
    %v106 = vunpack.c.l.b16 %v74
    %v107 = vunpack.c.l.b16 %v75
    %v108 = vunpack.c.l.b16 %v76
    %v109 = vunpack.c.l.b16 %v77
    %v110 = vunpack.c.l.b16 %v78
    %v111 = vunpack.c.l.b16 %v79
    %v112 = vunpack.c.l.b16 %v80
    %v113 = vpack.c.b16 %v98, %v97
    %v114 = vpack.c.b16 %v100, %v99
    %v115 = vpack.c.b16 %v102, %v101
    %v116 = vpack.c.b16 %v104, %v103
    %v117 = vpack.c.b16 %v106, %v105
    %v118 = vpack.c.b16 %v108, %v107
    %v119 = vpack.c.b16 %v110, %v109
    %v120 = vpack.c.b16 %v112, %v111
    %129 = vmatpush.bf16.msra.mxu0 %v120
    %130 = vmatpush.bf16.msra.mxu0 %v119
    %131 = vmatpush.bf16.msra.mxu0 %v118
    %132 = vmatpush.bf16.msra.mxu0 %v117
    %133 = vmatpush.bf16.msra.mxu0 %v116
    %134 = vmatpush.bf16.msra.mxu0 %v115
    %135 = vmatpush.bf16.msra.mxu0 %v114
    %136 = vmatpush.bf16.msra.mxu0 %v113
    %137 = vmatmul.bf16.gmra.mxu0 %v64
    %v138 = vpop.f32.mrf.mxu0
    %v139 = vadd.f32 0.0, %v138
    %v140 = vpop.f32.mrf.mxu0
    %141 = vdwg.mxu0
    %v142 = vadd.f32 %v63, %v139
    %143 = vst [vmem:[#allocation2] sm:$0xff] %v142
    // Predicated region
    $region30: #{tpu_custom_call.1} parent=1 // pred_check
      %p144 = pneg %p58
    $region31: #{tpu_custom_call.1} parent=1 // pred_check_branch
      %146 = sbr.rel (%p144) target = $region33
    $region32: #{tpu_custom_call.1} parent=1 // pred_region
      %v147 = vld [vmem:[#allocation2] sm:$0xff]
      %v148 = vrot.slane %v147, 4
      %v149 = vadd.f32 %v147, %v148
      %v150 = vrot.slane %v149, 2
      %v151 = vadd.f32 %v149, %v150
      %v152 = vrot.slane %v151, 1
      %v153 = vadd.f32 %v151, %v152
      %v154 = vmul.f32 %v147, %v147
      %v155 = vrot.slane %v154, 4
      %v156 = vadd.f32 %v154, %v155
      %v157 = vrot.slane %v156, 2
      %v158 = vadd.f32 %v156, %v157
      %v159 = vrot.slane %v158, 1
      %v160 = vadd.f32 %v158, %v159
      %v161 = vmul.f32 %v153, 0.125
      %v162 = vmul.f32 %v160, 0.125
      %v163 = vmul.f32 %v161, %v161
      %v164 = vsub.f32 %v162, %v163
      %v165 = vmax.f32 %v164, 0.0
      %v166 = vsub.f32 %v147, %v161
      %v167 = vadd.f32 %v165, 1e-05
      %v168 = vrsqrt.pop %v167
      %v169 = vmul.f32 %v168, %v167
      %v170 = vmul.f32 %v169, %v168
      %v171 = vmul.f32 0.5, %v170
      %v172 = vsub.f32 1.5, %v171
      %v173 = vmul.f32 %v168, %v172
      %vm174 = vweird.f32 %v167
      %vm175 = vweird.f32 %v168
      %vm176 = vmor %vm174, %vm175
      %v177 = vsel %vm176, %v168, %v173
      %v178 = vmul.f32 %v166, %v177
      %v179 = vmax.f32 %v178, 0.0
      %v180 = vld [vmem:[#allocation8] sm:$0xff]
      %vm181 = vcmp.ge.f32.partialorder %v180, 0.5
      %v182 = vmul.f32 %v179, 2.0
      %v183 = vsel %vm181, %v182, 0.0
      %184 = vst [vmem:[#allocation9] sm:$0xff] %v183
    $region33: #{tpu_custom_call.1} parent=1 // pred_fallthru
      _
    // Predicated region
    $region34: #{tpu_custom_call.1} parent=1 // pred_check
      _
    $region35: #{tpu_custom_call.1} parent=1 // pred_check_branch
      %186 = sbr.rel (0) target = $region37
    $region36: #{tpu_custom_call.1} parent=1 // pred_region
      %188 = vsyncadd [#allocation5], 0
      %s190 = sshll.u32 [#allocation9], 4
      %s191 = int_to_ptr.vmem [resolvable:$true] %s190
      %s192 = sshll.u32 %s3, 4
      %s193 = int_to_ptr.hbm [resolvable:$true] %s192
      %195 = dma.vmem_to_hbm [thread:$0]  %s191, 128, %s193, [#allocation5]
    $region37: #{tpu_custom_call.1} parent=1 // pred_fallthru
      _
    // Predicated region
    $region38: #{tpu_custom_call.1} parent=1 // pred_check
      _
    $region39: #{tpu_custom_call.1} parent=1 // pred_check_branch
      %197 = sbr.rel (0) target = $region41
    $region40: #{tpu_custom_call.1} parent=1 // pred_region
      %199 = dma.done [#allocation5], 128
    $region41: #{tpu_custom_call.1} parent=1 // pred_fallthru
      _
    %200 = vsyncpa [#allocation4], 1
    %201 = vsyncpa [#allocation7], 1
    %202 = vsyncpa [#allocation5], 1

</llo_original>
